<compile_context>
chip_gen: v7x
topology: tpu7x:2x2x1
jax: 0.10.0
libtpu: 0.0.40
codegen_flags: <defaults>
</compile_context>

<pallas_src>
import math
from functools import partial

import jax
import jax.numpy as jnp
from jax import lax
from jax.experimental import pallas as pl
from jax.experimental.pallas import tpu as pltpu


# ----------------------------------------------------------------------------
# Helpers
# ----------------------------------------------------------------------------
def _pick_tile(dim, pref, quantum):
    """Largest multiple of `quantum` <= pref that divides dim, else the full dim."""
    if dim <= pref:
        return dim
    t = (pref // quantum) * quantum
    while t >= quantum:
        if dim % t == 0:
            return t
        t -= quantum
    return dim


def _vmem_limit_bytes():
    # ~75% of physical VMEM: 48 MiB on v7x (64 MiB), 96 MiB on v5e/v6e (128 MiB).
    try:
        cap = int(pltpu.get_tpu_info().vmem_capacity_bytes)
        if cap <= 0:
            raise ValueError
    except Exception:
        cap = 64 * 1024 * 1024
    return max(32 * 1024 * 1024, (cap * 3) // 4)


# ----------------------------------------------------------------------------
# Tiled linear kernel: y = x @ w_t + b   (w_t is the pre-transposed weight, (K, N))
# ----------------------------------------------------------------------------
def _linear_kernel(x_ref, wt_ref, b_ref, o_ref, acc_ref):
    @pl.when(pl.program_id(2) == 0)
    def _():
        acc_ref[...] = jnp.zeros_like(acc_ref)

    acc_ref[...] += jnp.dot(
        x_ref[...].astype(jnp.bfloat16),
        wt_ref[...].astype(jnp.bfloat16),
        preferred_element_type=jnp.float32,
    )

    # Bias add + cast + store only once per output tile (on the final K step).
    @pl.when(pl.program_id(2) == pl.num_programs(2) - 1)
    def _():
        o_ref[...] = (acc_ref[...] + b_ref[...]).astype(o_ref.dtype)


def pallas_linear(x, w_t, b, out_dtype=None):
    """x: (M, K), w_t: (K, N) pre-transposed weight (bf16), b: (N,) -> (M, N)."""
    M, K = x.shape
    N = w_t.shape[1]
    out_dtype = out_dtype if out_dtype is not None else x.dtype
    tm = _pick_tile(M, 256, 16)
    tn = _pick_tile(N, 256, 128)
    tk = _pick_tile(K, 512, 128)
    grid = (M // tm, N // tn, K // tk)
    return pl.pallas_call(
        _linear_kernel,
        out_shape=jax.ShapeDtypeStruct((M, N), out_dtype),
        grid=grid,
        in_specs=[
            pl.BlockSpec((tm, tk), lambda i, j, k: (i, k)),
            pl.BlockSpec((tk, tn), lambda i, j, k: (k, j)),
            pl.BlockSpec((1, tn), lambda i, j, k: (0, j)),
        ],
        out_specs=pl.BlockSpec((tm, tn), lambda i, j, k: (i, j)),
        scratch_shapes=[pltpu.VMEM((tm, tn), jnp.float32)],
        compiler_params=pltpu.CompilerParams(
            dimension_semantics=("parallel", "parallel", "arbitrary")),
    )(x, w_t, b.reshape(1, N).astype(jnp.float32))


# ----------------------------------------------------------------------------
# AKT attention core: grid = (batch, query-tile); all heads fused per program.
# q/k/v enter lane-dense as (bs, S, d_model) bf16; output is (bs, S, d_model) bf16.
# ----------------------------------------------------------------------------
def _akt_attention_kernel(gamma_ref, q_ref, k_ref, v_ref, mask_ref, o_ref, *,
                          h, d_k, zero_pad):
    tq = q_ref.shape[1]
    S = k_ref.shape[1]
    inv_sqrt_dk = jnp.float32(1.0 / math.sqrt(d_k))
    neg_inf = jnp.float32(-1e32)
    qi = pl.program_id(1)

    q_all = q_ref[0]                      # (tq, d_model) bf16, lane-dense
    k_all = k_ref[0]                      # (S,  d_model) bf16
    v_all = v_ref[0]

    keep = mask_ref[...] != 0             # (tq, S) bool (mask ships as int8)

    # (tq,S)/(S,S) constants generated in-kernel (cheap VPU iota+compare) instead of
    # being shipped from HBM and held resident/double-buffered in VMEM.
    local_row = lax.broadcasted_iota(jnp.int32, (tq, 1), 0)
    row = qi * tq + local_row                                   # global query row idx
    col = lax.broadcasted_iota(jnp.int32, (tq, S), 1)
    pos = jnp.abs(col - row).astype(jnp.float32)                # |i - j|
    # Strict-upper "remaining mass" matrix: U[j, c] = 1 iff j > c.
    upper = (lax.broadcasted_iota(jnp.int32, (S, S), 0) >
             lax.broadcasted_iota(jnp.int32, (S, S), 1)).astype(jnp.bfloat16)
    row_is_first = row == 0                                     # (tq, 1), for zero_pad

    nt_dims = (((1,), (1,)), ((), ()))    # contract last dims: q @ k^T w/o transpose

    for hh in range(h):                   # static loop: back-to-back MXU work per head
        lo = hh * d_k
        q = q_all[:, lo:lo + d_k]         # (tq, d_k) bf16
        k = k_all[:, lo:lo + d_k]         # (S,  d_k) bf16
        v = v_all[:, lo:lo + d_k]
        neg_gamma = gamma_ref[hh]         # SMEM scalar: -softplus(gamma_h) <= 0

        scores = lax.dot_general(q, k, nt_dims,
                                 preferred_element_type=jnp.float32) * inv_sqrt_dk

        # --- "no_grad" distance branch (masked softmax, remaining attention mass) ---
        s_ = jnp.where(keep, scores, neg_inf)
        s_ = s_ - jnp.max(s_, axis=-1, keepdims=True)
        e_ = jnp.exp(s_)                  # exactly 0 on masked lanes (f32 underflow)
        p_ = e_ * pl.reciprocal(jnp.sum(e_, axis=-1, keepdims=True), approx=True)
        # disttotal - distcum == sum_{j > c} p[:, j] (masked lanes are exact zeros),
        # folded into a single strict-upper matmul: no row-sum, no broadcast subtract,
        # no near-diagonal cancellation.
        # TODO(synk): for very large S replace with a blocked prefix sum (per-128-lane
        # triangular matmul + running block-sum carry) to cut the O(S) contraction to
        # O(block) per column.
        remain = jnp.dot(p_.astype(jnp.bfloat16), upper,
                         preferred_element_type=jnp.float32)
        dist = jnp.sqrt(jnp.maximum(remain * pos, 0.0))
        # neg_gamma <= 0 and dist >= 0  =>  exp(.) <= 1, so the reference's upper clip
        # at 1e5 is dead; only the lower clamp survives.
        total_effect = jnp.maximum(jnp.exp(dist * neg_gamma), jnp.float32(1e-5))

        # --- final masked softmax + PV ---
        sc = jnp.where(keep, scores * total_effect, neg_inf)
        sc = sc - jnp.max(sc, axis=-1, keepdims=True)
        es = jnp.exp(sc)
        probs = es * pl.reciprocal(jnp.sum(es, axis=-1, keepdims=True), approx=True)

        # dropout is identity in eval mode (no RNG applied).
        out_h = jnp.dot(probs.astype(jnp.bfloat16), v,
                        preferred_element_type=jnp.float32)
        if zero_pad:
            out_h = jnp.where(row_is_first, jnp.float32(0.0), out_h)
        # Per-head store bounds live ranges: big (tq,S) intermediates get reused across
        # heads instead of piling up for a final concatenate/relayout.
        o_ref[0, :, lo:lo + d_k] = out_h.astype(o_ref.dtype)


def akt_attention_core(neg_gamma, q_p, k_p, v_p, mask_i8, *, n_heads, d_k, zero_pad):
    """q_p/k_p/v_p: (bs, S, d_model) bf16; mask_i8: (S, S) int8; neg_gamma: (h,) f32."""
    bs, S, dm = q_p.shape
    tq = _pick_tile(S, 128, 8)            # query-row tile (full S when small)
    kernel = partial(_akt_attention_kernel, h=n_heads, d_k=d_k, zero_pad=zero_pad)
    return pl.pallas_call(
        kernel,
        out_shape=jax.ShapeDtypeStruct((bs, S, dm), jnp.bfloat16),
        grid=(bs, S // tq),
        in_specs=[
            pl.BlockSpec(memory_space=pltpu.MemorySpace.SMEM),     # neg_gamma (h,)
            pl.BlockSpec((1, tq, dm), lambda b, qi: (b, qi, 0)),   # q tile
            pl.BlockSpec((1, S, dm), lambda b, qi: (b, 0, 0)),     # full K per batch
            pl.BlockSpec((1, S, dm), lambda b, qi: (b, 0, 0)),     # full V per batch
            pl.BlockSpec((tq, S), lambda b, qi: (qi, 0)),          # mask tile (int8)
        ],
        out_specs=pl.BlockSpec((1, tq, dm), lambda b, qi: (b, qi, 0)),
        compiler_params=pltpu.CompilerParams(
            dimension_semantics=("parallel", "parallel"),
            vmem_limit_bytes=_vmem_limit_bytes(),
        ),
    )(neg_gamma, q_p, k_p, v_p, mask_i8)


# ----------------------------------------------------------------------------
# Module wrapper (parameter setup / reshapes are plain-JAX glue)
# ----------------------------------------------------------------------------
class MultiHeadAttentionPallas:
    def __init__(self, d_model, d_feature, n_heads, dropout, kq_same,
                 bias=True, *, key):
        assert d_model == d_feature * n_heads
        self.d_model = d_model
        self.d_k = d_feature
        self.h = n_heads
        self.kq_same = kq_same
        self.dropout = dropout  # eval mode: identity

        keys = jax.random.split(key, 5)

        def xavier(k, shape):
            fan_out, fan_in = shape
            bound = math.sqrt(6.0 / (fan_in + fan_out))
            return jax.random.uniform(k, shape, jnp.float32, -bound, bound)

        p = {}
        p["k_w"] = xavier(keys[0], (d_model, d_model))
        p["k_b"] = jnp.zeros((d_model,), jnp.float32)
        p["v_w"] = xavier(keys[1], (d_model, d_model))
        p["v_b"] = jnp.zeros((d_model,), jnp.float32)
        if not kq_same:
            p["q_w"] = xavier(keys[2], (d_model, d_model))
            p["q_b"] = jnp.zeros((d_model,), jnp.float32)
        p["out_w"] = xavier(keys[3], (d_model, d_model))
        p["out_b"] = jnp.zeros((d_model,), jnp.float32)
        # gammas: (h, 1, 1); torch xavier_uniform_ -> fan_in = 1, fan_out = h
        gb = math.sqrt(6.0 / (1 + n_heads))
        p["gammas"] = jax.random.uniform(keys[4], (n_heads, 1, 1),
                                         jnp.float32, -gb, gb)
        self.params = p

        # Pre-transposed bf16 weights (halves HBM traffic of the memory-bound linears).
        wt_k = p["k_w"].T.astype(jnp.bfloat16)
        wt_v = p["v_w"].T.astype(jnp.bfloat16)
        self.wt = {"k": wt_k, "v": wt_v, "out": p["out_w"].T.astype(jnp.bfloat16)}
        if not kq_same:
            self.wt["q"] = p["q_w"].T.astype(jnp.bfloat16)

        # Fused QKV projection weight for the self-attention (q is k is v) fast path.
        if kq_same:
            self.wt_qkv = jnp.concatenate([wt_k, wt_v], axis=1)
            self.b_qkv = jnp.concatenate([p["k_b"], p["v_b"]])
        else:
            self.wt_qkv = jnp.concatenate([self.wt["q"], wt_k, wt_v], axis=1)
            self.b_qkv = jnp.concatenate([p["q_b"], p["k_b"], p["v_b"]])

    def __call__(self, q, k, v, mask, zero_pad):
        p = self.params
        bs, S, dm = q.shape
        mask_i8 = mask.astype(jnp.int8)

        def lin(x, wt, b):
            return pallas_linear(x.reshape(bs * S, dm).astype(jnp.bfloat16),
                                 wt, b, out_dtype=jnp.bfloat16)

        if (q is k) and (k is v):
            # Self-attention fast path: read the activation once, one launch.
            qkv = lin(q, self.wt_qkv, self.b_qkv)
            if self.kq_same:
                k_p = qkv[:, :dm]
                v_p = qkv[:, dm:2 * dm]
                q_p = k_p
            else:
                q_p = qkv[:, :dm]
                k_p = qkv[:, dm:2 * dm]
                v_p = qkv[:, 2 * dm:]
        else:
            k_p = lin(k, self.wt["k"], p["k_b"])
            v_p = lin(v, self.wt["v"], p["v_b"])
            if self.kq_same:
                q_p = lin(q, self.wt["k"], p["k_b"])
            else:
                q_p = lin(q, self.wt["q"], p["q_b"])

        q_p = q_p.reshape(bs, S, dm)
        k_p = k_p.reshape(bs, S, dm)
        v_p = v_p.reshape(bs, S, dm)

        neg_gamma = (-jax.nn.softplus(p["gammas"])).reshape(self.h).astype(jnp.float32)

        attn = akt_attention_core(neg_gamma, q_p, k_p, v_p, mask_i8,
                                  n_heads=self.h, d_k=self.d_k, zero_pad=zero_pad)
        # attn is already (bs, S, d_model) lane-dense bf16 -> straight into out proj.
        out = pallas_linear(attn.reshape(bs * S, dm), self.wt["out"], p["out_b"],
                            out_dtype=jnp.float32).reshape(bs, S, dm)
        return out


# ----------------------------------------------------------------------------
# Pure-JAX f32 reference (mirrors the PyTorch forward exactly, eval mode)
# ----------------------------------------------------------------------------
def reference_mha(params, q, k, v, mask, zero_pad, kq_same, h, d_k):
    bs, S, dm = q.shape

    def lin(x, w, b):
        return x @ w.T + b

    k_ = lin(k, params["k_w"], params["k_b"]).reshape(bs, S, h, d_k).transpose(0, 2, 1, 3)
    v_ = lin(v, params["v_w"], params["v_b"]).reshape(bs, S, h, d_k).transpose(0, 2, 1, 3)
    if kq_same:
        q_ = lin(q, params["k_w"], params["k_b"]).reshape(bs, S, h, d_k).transpose(0, 2, 1, 3)
    else:
        q_ = lin(q, params["q_w"], params["q_b"]).reshape(bs, S, h, d_k).transpose(0, 2, 1, 3)

    scores = jnp.einsum("bhqd,bhkd->bhqk", q_, k_) / math.sqrt(d_k)
    maskb = (mask == 0)[None, None]
    maskf = mask.astype(jnp.float32)[None, None]

    scores_ = jnp.where(maskb, -1e32, scores)
    scores_ = jax.nn.softmax(scores_, axis=-1) * maskf
    distcum = jnp.cumsum(scores_, axis=-1)
    disttotal = jnp.sum(scores_, axis=-1, keepdims=True)
    idx = jnp.arange(S)
    pos = jnp.abs(idx[None, :] - idx[:, None]).astype(jnp.float32)[None, None]
    dist_scores = jnp.sqrt(jnp.clip((disttotal - distcum) * pos, 0.0, None))
    gamma = (-jax.nn.softplus(params["gammas"]))[None]          # (1, h, 1, 1)
    total_effect = jnp.clip(jnp.exp(dist_scores * gamma), 1e-5, 1e5)

    scores = scores * total_effect
    scores = jnp.where(maskb, -1e32, scores)
    scores = jax.nn.softmax(scores, axis=-1)
    if zero_pad:
        scores = scores.at[:, :, 0, :].set(0.0)
    out = jnp.einsum("bhqk,bhkd->bhqd", scores, v_)
    concat = out.transpose(0, 2, 1, 3).reshape(bs, S, dm)
    return lin(concat, params["out_w"], params["out_b"])


if __name__ == "__main__":
    bs, S, d_model, n_heads = 2, 8, 32, 4
    d_k = d_model // n_heads
    kq_same = False
    zero_pad = True
    dropout_p = 0.1  # eval mode -> identity

    root = jax.random.PRNGKey(0)
    k_params, k_q, k_k, k_v = jax.random.split(root, 4)

    mha = MultiHeadAttentionPallas(d_model, d_k, n_heads, dropout_p, kq_same,
                                   bias=True, key=k_params)

    q = jax.random.normal(k_q, (bs, S, d_model), jnp.float32)
    k = jax.random.normal(k_k, (bs, S, d_model), jnp.float32)
    v = jax.random.normal(k_v, (bs, S, d_model), jnp.float32)
    mask = jnp.tril(jnp.ones((S, S), jnp.int32))   # causal: 1 = attend, 0 = masked

    def check(out, ref):
        # bf16 weight/activation I/O vs. the all-f32 reference -> normalized tolerance.
        err = float(jnp.max(jnp.abs(out - ref)))
        scale = float(jnp.max(jnp.abs(ref)))
        assert err <= 0.05 * scale + 1e-2, (err, scale)

    # General (cross-attention style) path: separate q/k/v projections.
    out = jax.block_until_ready(mha(q, k, v, mask, zero_pad))
    assert out.shape == (bs, S, d_model)
    ref = reference_mha(mha.params, q, k, v, mask, zero_pad, kq_same, n_heads, d_k)
    check(out, ref)

    # Self-attention path: fused QKV projection (activation read once).
    out_sa = jax.block_until_ready(mha(q, q, q, mask, zero_pad))
    ref_sa = reference_mha(mha.params, q, q, q, mask, zero_pad, kq_same, n_heads, d_k)
    check(out_sa, ref_sa)

    print("KERNEL_OK")
</pallas_src>

<mosaic_0001>
module attributes {stable_mosaic.version = 11 : i64} {
  func.func @_linear_kernel(%arg0: i32, %arg1: i32, %arg2: i32, %arg3: memref<16x32xbf16, #tpu.memory_space<vmem>>, %arg4: memref<32x32xbf16, #tpu.memory_space<vmem>>, %arg5: memref<1x32xf32, #tpu.memory_space<vmem>>, %arg6: memref<16x32xbf16, #tpu.memory_space<vmem>>, %arg7: memref<16x32xf32, #tpu.memory_space<vmem>>) attributes {dimension_semantics = [#tpu.dimension_semantics<parallel>, #tpu.dimension_semantics<parallel>, #tpu.dimension_semantics<arbitrary>], iteration_bounds = array<i64: 1, 1, 1>, scalar_prefetch = 0 : i64, scratch_operands = 1 : i64, tpu.core_type = #tpu.core_type<tc>, window_params = [{transform_indices = @transform_0, window_bounds = array<i64: 16, 32>}, {transform_indices = @transform_1, window_bounds = array<i64: 32, 32>}, {transform_indices = @transform_2, window_bounds = array<i64: 1, 32>}, {transform_indices = @transform_3, window_bounds = array<i64: 16, 32>}]} {
    %c0_i32 = arith.constant 0 : i32
    %0 = arith.cmpi eq, %arg2, %c0_i32 : i32
    %1 = arith.extui %0 : i1 to i32
    %c0_i32_0 = arith.constant 0 : i32
    %2 = arith.cmpi ne, %1, %c0_i32_0 : i32
    scf.if %2 {
      %cst_10 = arith.constant 0.000000e+00 : f32
      %12 = vector.broadcast %cst_10 : f32 to vector<16x32xf32>
      %c0_11 = arith.constant 0 : index
      %c0_12 = arith.constant 0 : index
      %13 = vector.load %arg7[%c0_11, %c0_12] : memref<16x32xf32, #tpu.memory_space<vmem>>, vector<16x32xf32>
      tpu.vector_store %arg7[%c0_11, %c0_12], %12 {strides = array<i32>} : memref<16x32xf32, #tpu.memory_space<vmem>>, vector<16x32xf32>,
    } else {
    }
    %c0 = arith.constant 0 : index
    %c0_1 = arith.constant 0 : index
    %3 = vector.load %arg7[%c0, %c0_1] : memref<16x32xf32, #tpu.memory_space<vmem>>, vector<16x32xf32>
    %c0_2 = arith.constant 0 : index
    %c0_3 = arith.constant 0 : index
    %4 = vector.load %arg3[%c0_2, %c0_3] : memref<16x32xbf16, #tpu.memory_space<vmem>>, vector<16x32xbf16>
    %c0_4 = arith.constant 0 : index
    %c0_5 = arith.constant 0 : index
    %5 = vector.load %arg4[%c0_4, %c0_5] : memref<32x32xbf16, #tpu.memory_space<vmem>>, vector<32x32xbf16>
    %cst = arith.constant dense<0.000000e+00> : vector<16x32xf32>
    %6 = tpu.matmul %4, %5, %cst {dimension_numbers = #tpu.dot_dimension_numbers<[1], [0], [0], [1], [0, 0, 1, 1], [], []>} : vector<16x32xbf16>, vector<32x32xbf16>, vector<16x32xf32> -> vector<16x32xf32>
    %7 = arith.addf %3, %6 : vector<16x32xf32>
    %c0_6 = arith.constant 0 : index
    %c0_7 = arith.constant 0 : index
    %8 = vector.load %arg7[%c0_6, %c0_7] : memref<16x32xf32, #tpu.memory_space<vmem>>, vector<16x32xf32>
    tpu.vector_store %arg7[%c0_6, %c0_7], %7 {strides = array<i32>} : memref<16x32xf32, #tpu.memory_space<vmem>>, vector<16x32xf32>,
    %c0_i32_8 = arith.constant 0 : i32
    %9 = arith.cmpi eq, %arg2, %c0_i32_8 : i32
    %10 = arith.extui %9 : i1 to i32
    %c0_i32_9 = arith.constant 0 : i32
    %11 = arith.cmpi ne, %10, %c0_i32_9 : i32
    scf.if %11 {
      %c0_10 = arith.constant 0 : index
      %c0_11 = arith.constant 0 : index
      %12 = vector.load %arg7[%c0_10, %c0_11] : memref<16x32xf32, #tpu.memory_space<vmem>>, vector<16x32xf32>
      %c0_12 = arith.constant 0 : index
      %c0_13 = arith.constant 0 : index
      %13 = vector.load %arg5[%c0_12, %c0_13] : memref<1x32xf32, #tpu.memory_space<vmem>>, vector<1x32xf32>
      %14 = vector.broadcast %13 : vector<1x32xf32> to vector<16x32xf32>
      %15 = arith.addf %12, %14 : vector<16x32xf32>
      %16 = arith.truncf %15 : vector<16x32xf32> to vector<16x32xbf16>
      %c0_14 = arith.constant 0 : index
      %c0_15 = arith.constant 0 : index
      %17 = vector.load %arg6[%c0_14, %c0_15] : memref<16x32xbf16, #tpu.memory_space<vmem>>, vector<16x32xbf16>
      tpu.vector_store %arg6[%c0_14, %c0_15], %16 {strides = array<i32>} : memref<16x32xbf16, #tpu.memory_space<vmem>>, vector<16x32xbf16>,
    } else {
    }
    return
  }
  func.func @transform_0(%arg0: i32, %arg1: i32, %arg2: i32) -> (i32, i32) {
    %c0_i32 = arith.constant 0 : i32
    return %arg0, %arg2 : i32, i32
  }
  func.func @transform_1(%arg0: i32, %arg1: i32, %arg2: i32) -> (i32, i32) {
    %c0_i32 = arith.constant 0 : i32
    return %arg2, %arg1 : i32, i32
  }
  func.func @transform_2(%arg0: i32, %arg1: i32, %arg2: i32) -> (i32, i32) {
    %c0_i32 = arith.constant 0 : i32
    %c0_i32_0 = arith.constant 0 : i32
    return %c0_i32, %arg1 : i32, i32
  }
  func.func @transform_3(%arg0: i32, %arg1: i32, %arg2: i32) -> (i32, i32) {
    %c0_i32 = arith.constant 0 : i32
    return %arg0, %arg1 : i32, i32
  }
}

</mosaic_0001>

<llo_original>
// kernel: tpu_custom_call.1
$region0: #{tpu_custom_call.1}
  #allocation0 [shape = 'u32[]', space=smem, size = 0x4, offset = 0x4, fixed_abs, tag = 'smem constant byte address 0x4 - core index']
  #allocation1 [shape = 'u32[144,128]{1,0:T(1,128)}', space=vmem, size = 0x12000, scoped, tag = 'internal scratch']
  #allocation2 [shape = 'f32[16,32]{1,0:T(8,128)}', space=vmem, size = 0x2000, scoped, tag = 'scratch operand']
  %s0 = inlined_call_operand.hbm [shape: bf16[16,32], index: 0, kind: input, shape index: {}]
  %s1 = inlined_call_operand.hbm [shape: bf16[32,32], index: 1, kind: input, shape index: {}]
  %s2 = inlined_call_operand.vmem [shape: f32[1,32], index: 2, kind: input, shape index: {}]
  %s3 = inlined_call_operand.hbm [shape: bf16[16,32], index: 3, kind: output, shape index: {}]
  %s4 = sld [smem:[#allocation0]]
  $region38: #{tpu_custom_call.1} parent=0
    _
  %s6 = ssub.s32 1, %s4
  %s7 = scalar_select 0, %s6, %s4
  $region1: #{tpu_custom_call.1} parent=0
    #allocation3 [shape = 'u8[4096]{0}', space=vmem, size = 0x1000, scoped, tag = 'input window, operand 0, single buffered']
    #allocation4 [shape = 's32[1]{0}', space=sflag, size = 0x4, scoped, tag = 'scoped memory for tpu_custom_call.1']
    #allocation5 [shape = 's32[1]{0}', space=sflag, size = 0x4, scoped, tag = 'scoped memory for tpu_custom_call.1']
    #allocation6 [shape = 'u8[8192]{0}', space=vmem, size = 0x2000, scoped, tag = 'input window, operand 1, single buffered']
    #allocation7 [shape = 's32[1]{0}', space=sflag, size = 0x4, scoped, tag = 'scoped memory for tpu_custom_call.1']
    #allocation8 [shape = 'u8[4096]{0}', space=vmem, size = 0x1000, scoped, tag = 'output window, operand 0, single buffered']
    %8 = vsyncpa [#allocation4], 0
    %9 = vsyncpa [#allocation7], 0
    %10 = vsyncpa [#allocation5], 0
    // Predicated region
    $region2: #{tpu_custom_call.1} parent=1 // pred_check
      _
    $region3: #{tpu_custom_call.1} parent=1 // pred_check_branch
      %12 = sbr.rel (0) target = $region5
    $region4: #{tpu_custom_call.1} parent=1 // pred_region
      %s14 = ssub.s32 128, 128
      %15 = vsyncadd [#allocation4], %s14
      %s16 = sshll.u32 [#allocation3], 4
      %s17 = int_to_ptr.vmem [resolvable:$true] %s16
      %22 = dma.hbm_to_vmem [thread:$0]  %s0, 128, %s17, [#allocation4], 64, 64, 4
    $region5: #{tpu_custom_call.1} parent=1 // pred_fallthru
      _
    // Predicated region
    $region6: #{tpu_custom_call.1} parent=1 // pred_check
      _
    $region7: #{tpu_custom_call.1} parent=1 // pred_check_branch
      %24 = sbr.rel (0) target = $region9
    $region8: #{tpu_custom_call.1} parent=1 // pred_region
      %s26 = ssub.s32 256, 256
      %27 = vsyncadd [#allocation7], %s26
      %s28 = sshll.u32 [#allocation6], 4
      %s29 = int_to_ptr.vmem [resolvable:$true] %s28
      %34 = dma.hbm_to_vmem [thread:$0]  %s1, 256, %s29, [#allocation7], 64, 64, 4
    $region9: #{tpu_custom_call.1} parent=1 // pred_fallthru
      _
    // Predicated region
    $region10: #{tpu_custom_call.1} parent=1 // pred_check
      _
    $region11: #{tpu_custom_call.1} parent=1 // pred_check_branch
      %36 = sbr.rel (0) target = $region13
    $region12: #{tpu_custom_call.1} parent=1 // pred_region
      _
    $region13: #{tpu_custom_call.1} parent=1 // pred_fallthru
      _
    // Predicated region
    $region14: #{tpu_custom_call.1} parent=1 // pred_check
      _
    $region15: #{tpu_custom_call.1} parent=1 // pred_check_branch
      %38 = sbr.rel (0) target = $region17
    $region16: #{tpu_custom_call.1} parent=1 // pred_region
      %39 = dma.done [#allocation4], 128
    $region17: #{tpu_custom_call.1} parent=1 // pred_fallthru
      _
    // Predicated region
    $region18: #{tpu_custom_call.1} parent=1 // pred_check
      _
    $region19: #{tpu_custom_call.1} parent=1 // pred_check_branch
      %41 = sbr.rel (0) target = $region21
    $region20: #{tpu_custom_call.1} parent=1 // pred_region
      %42 = dma.done [#allocation7], 256
    $region21: #{tpu_custom_call.1} parent=1 // pred_fallthru
      _
    %p44 = scmp.eq.s32.totalorder 0, 0
    // Predicated region
    $region22: #{tpu_custom_call.1} parent=1 // pred_check
      %p45 = pneg %p44
    $region23: #{tpu_custom_call.1} parent=1 // pred_check_branch
      %47 = sbr.rel (%p45) target = $region25
    $region24: #{tpu_custom_call.1} parent=1 // pred_region
      %vm48 = vcmask 261120
      %49 = vst.msk [vmem:[#allocation2] sm:$0xff] %vm48, 0.0
      %50 = vst.msk [vmem:[#allocation2 + $0x8] sm:$0xff] %vm48, 0.0
    $region25: #{tpu_custom_call.1} parent=1 // pred_fallthru
      _
    %v51 = vld [vmem:[#allocation2] sm:$0xff]
    %v52 = vld [vmem:[#allocation2 + $0x8] sm:$0xff]
    %v53 = vld [vmem:[#allocation3] sm:$0xf]
    %v54 = vld [vmem:[#allocation3 + $0x4] sm:$0xf]
    %v55 = vld [vmem:[#allocation6] sm:$0xf]
    %v56 = vld [vmem:[#allocation6 + $0x4] sm:$0xf]
    %v57 = vld [vmem:[#allocation6 + $0x8] sm:$0xf]
    %v58 = vld [vmem:[#allocation6 + $0xc] sm:$0xf]
    %v61 = vunpack.c.l.b16 %v53
    %v62 = vunpack.c.l.b16 %v54
    %v63 = vpack.c.b16 %v62, %v61
    %v68 = vunpack.c.l.b16 %v55
    %v69 = vunpack.c.l.b16 %v56
    %v70 = vunpack.c.l.b16 %v57
    %v71 = vunpack.c.l.b16 %v58
    %v72 = vpack.c.b16 %v69, %v68
    %v73 = vpack.c.b16 %v71, %v70
    %vm76 = vcmask 261120
    %v78 = vsel %vm76, %v63, 0
    %80 = vmatprep.subr.bf16.mxu0 0
    %81 = vmatpush1.bf16.msra.mxu0 %v72
    %82 = vmatprep.subr.bf16.mxu0 0
    %83 = vmatpush1.bf16.msra.mxu0 %v73
    %84 = vmatprep.subr.bf16.mxu0 0
    %85 = vmatpush1.bf16.msra.mxu0 0
    %86 = vmatprep.subr.bf16.mxu0 0
    %87 = vmatpush1.bf16.msra.mxu0 0
    %88 = vmatprep.subr.bf16.mxu0 0
    %89 = vmatpush1.bf16.msra.mxu0 0
    %90 = vmatprep.subr.bf16.mxu0 0
    %91 = vmatpush1.bf16.msra.mxu0 0
    %92 = vmatprep.subr.bf16.mxu0 0
    %93 = vmatpush1.bf16.msra.mxu0 0
    %94 = vmatprep.subr.bf16.mxu0 0
    %95 = vmatpush1.bf16.msra.mxu0 0
    %96 = vmatprep.subr.bf16.mxu0 0
    %97 = vmatpush1.bf16.msra.mxu0 0
    %98 = vmatprep.subr.bf16.mxu0 0
    %99 = vmatpush1.bf16.msra.mxu0 0
    %100 = vmatprep.subr.bf16.mxu0 0
    %101 = vmatpush1.bf16.msra.mxu0 0
    %102 = vmatprep.subr.bf16.mxu0 0
    %103 = vmatpush1.bf16.msra.mxu0 0
    %104 = vmatprep.subr.bf16.mxu0 0
    %105 = vmatpush1.bf16.msra.mxu0 0
    %106 = vmatprep.subr.bf16.mxu0 0
    %107 = vmatpush1.bf16.msra.mxu0 0
    %108 = vmatprep.subr.bf16.mxu0 0
    %109 = vmatpush1.bf16.msra.mxu0 0
    %110 = vmatprep.subr.bf16.mxu0 0
    %111 = vmatpush1.bf16.msra.mxu0 0
    %112 = vmatprep.mubr.bf16.mxu0 0
    %113 = vmatmul.mubr.bf16.gmra.mrb[0].mxu0 %v78
    %v114 = vpop.f32.mrb[0].mxu0
    %v115 = vadd.f32 0.0, %v114
    %v116 = vpop.f32.mrb[0].mxu0
    %v117 = vpop.f32.mrb[0].mxu0
    %v118 = vadd.f32 0.0, %v117
    %v119 = vpop.f32.mrb[0].mxu0
    %120 = vdwg.mxu0
    %v121 = vadd.f32 %v51, %v115
    %v122 = vadd.f32 %v52, %v118
    %123 = vst.msk [vmem:[#allocation2] sm:$0xff] %vm76, %v121
    %124 = vst.msk [vmem:[#allocation2 + $0x8] sm:$0xff] %vm76, %v122
    // Predicated region
    $region26: #{tpu_custom_call.1} parent=1 // pred_check
      %p125 = pneg %p44
    $region27: #{tpu_custom_call.1} parent=1 // pred_check_branch
      %127 = sbr.rel (%p125) target = $region29
    $region28: #{tpu_custom_call.1} parent=1 // pred_region
      %v128 = vld [vmem:[#allocation2] sm:$0xff]
      %v129 = vld [vmem:[#allocation2 + $0x8] sm:$0xff]
      %v130 = vld [vmem:[%s2] sm:$0x1]
      %v132 = vlaneseq
      %v133 = vshrl.u32 %v132, 7
      %v134 = vsub.s32 0, %v133
      %v135 = vrot.slane %v130, %v134
      %v137 = vadd.f32 %v128, %v135
      %v138 = vadd.f32 %v129, %v135
      %v139 = vpack.c.bf16 %v138, %v137
      %v141 = vunpack.c.l.b16 %v139
      %v142 = vunpack.c.h.b16 %v139
      %v143 = vpack.c.b16 %v141, %v141
      %v144 = vpack.c.b16 %v142, %v142
      %vm147 = vcmask 257024
      %148 = vst.msk [vmem:[#allocation8] sm:$0xf] %vm147, %v143
      %149 = vst.msk [vmem:[#allocation8 + $0x4] sm:$0xf] %vm147, %v144
    $region29: #{tpu_custom_call.1} parent=1 // pred_fallthru
      _
    // Predicated region
    $region30: #{tpu_custom_call.1} parent=1 // pred_check
      _
    $region31: #{tpu_custom_call.1} parent=1 // pred_check_branch
      %151 = sbr.rel (0) target = $region33
    $region32: #{tpu_custom_call.1} parent=1 // pred_region
      %s153 = ssub.s32 128, 128
      %154 = vsyncadd [#allocation5], %s153
      %s155 = sshll.u32 [#allocation8], 4
      %s156 = int_to_ptr.vmem [resolvable:$true] %s155
      %161 = dma.vmem_to_hbm [thread:$0]  %s156, 128, %s3, [#allocation5], 64, 64, 4
    $region33: #{tpu_custom_call.1} parent=1 // pred_fallthru
      _
    // Predicated region
    $region34: #{tpu_custom_call.1} parent=1 // pred_check
      _
    $region35: #{tpu_custom_call.1} parent=1 // pred_check_branch
      %163 = sbr.rel (0) target = $region37
    $region36: #{tpu_custom_call.1} parent=1 // pred_region
      %164 = dma.done [#allocation5], 128
    $region37: #{tpu_custom_call.1} parent=1 // pred_fallthru
      _
    %165 = vsyncpa [#allocation4], 1
    %166 = vsyncpa [#allocation7], 1
    %167 = vsyncpa [#allocation5], 1

</llo_original>
